<compile_context>
chip_gen: v7x
topology: tpu7x:2x2x1
jax: 0.10.0
libtpu: 0.0.40
codegen_flags: <defaults>
</compile_context>

<pallas_src>
import jax
import jax.numpy as jnp
from jax.experimental import pallas as pl
from jax.experimental.pallas import tpu as pltpu


# ---------------------------------------------------------------------------
# Pallas kernel: single HBM -> HBM DMA (identity copy, no VMEM staging).
# ---------------------------------------------------------------------------
def _hbm_copy_kernel(x_ref, o_ref, sem):
    copy = pltpu.make_async_copy(x_ref, o_ref, sem)
    copy.start()
    copy.wait()


def _materialized_copy(x: jax.Array) -> jax.Array:
    """Physically copy `x` into a fresh HBM buffer with one DMA."""
    itemsize = jnp.dtype(x.dtype).itemsize
    return pl.pallas_call(
        _hbm_copy_kernel,
        out_shape=jax.ShapeDtypeStruct(x.shape, x.dtype),
        in_specs=[pl.BlockSpec(memory_space=pl.ANY)],
        out_specs=pl.BlockSpec(memory_space=pl.ANY),
        scratch_shapes=[pltpu.SemaphoreType.DMA],
        # Pure memory-bound custom call: 1 read + 1 write of the tensor.
        cost_estimate=pl.CostEstimate(
            flops=0,
            transcendentals=0,
            bytes_accessed=2 * x.size * itemsize,
        ),
    )(x)


# ---------------------------------------------------------------------------
# Reshape module equivalent
# ---------------------------------------------------------------------------
class Reshape:
    """JAX/Pallas equivalent of torch Reshape(*shape): x.view(*shape).

    By default the reshape is metadata-only (free, matches .view() semantics:
    no data movement).  Pass materialize=True to force a fresh physical buffer
    via a single HBM->HBM DMA Pallas kernel.
    """

    def __init__(self, *shape, materialize: bool = False):
        self.shape = shape
        self.materialize = materialize

    def _resolve_shape(self, numel: int):
        shape = list(self.shape)
        neg = [i for i, s in enumerate(shape) if s == -1]
        if len(neg) > 1:
            raise ValueError("only one -1 dimension allowed")
        if neg:
            known = 1
            for s in shape:
                if s != -1:
                    known *= s
            shape[neg[0]] = numel // known if known else 0
        total = 1
        for s in shape:
            total *= s
        if total != numel:
            raise ValueError(f"cannot view {numel} elements as {tuple(shape)}")
        return tuple(shape)

    def __call__(self, x: jax.Array) -> jax.Array:
        out_shape = self._resolve_shape(x.size)

        # Default / fast path: metadata-only reshape (bitcast in XLA) — zero
        # HBM traffic, strictly fastest on v5e / v6e / v7x.
        if not self.materialize or x.size == 0:
            return x.reshape(out_shape)

        # Materialized path: row-major reshape (still metadata-only), then one
        # HBM->HBM DMA into a fresh buffer of the output shape.
        return _materialized_copy(x.reshape(out_shape))


# ---------------------------------------------------------------------------
# Demo / self-test
# ---------------------------------------------------------------------------
if __name__ == "__main__":
    key = jax.random.PRNGKey(0)

    # NCHW input, as a conv feature map would be: (batch=2, channels=4, 16, 16)
    x = jax.random.normal(key, (2, 4, 16, 16), dtype=jnp.float32)

    # Default usage: flatten channel+spatial dims per batch (metadata-only).
    y = jax.block_until_ready(Reshape(-1, 4 * 16 * 16)(x))
    assert y.shape == (2, 1024), y.shape
    assert y.dtype == x.dtype
    assert bool(jnp.array_equal(y, x.reshape(2, 1024))), "reshape mismatch"

    # Materialized path exercises the Pallas HBM->HBM DMA copy kernel.
    ym = jax.block_until_ready(Reshape(-1, 4 * 16 * 16, materialize=True)(x))
    assert ym.shape == (2, 1024)
    assert bool(jnp.array_equal(ym, x.reshape(2, 1024))), "DMA copy mismatch"

    # bf16 through the DMA copy path.
    xb = x.astype(jnp.bfloat16)
    yb = jax.block_until_ready(Reshape(2, -1, materialize=True)(xb))
    assert bool(jnp.array_equal(yb, xb.reshape(2, -1))), "bf16 reshape mismatch"

    # Awkward (non 8x128-tileable) element count: the DMA copy handles any
    # shape directly — no tiling constraints, no fallback padding needed.
    xs = jax.random.normal(key, (2, 3, 5), dtype=jnp.float32)
    ys = jax.block_until_ready(Reshape(-1, materialize=True)(xs))
    assert bool(jnp.array_equal(ys, xs.reshape(-1))), "odd-shape reshape mismatch"

    print("KERNEL_OK")
</pallas_src>

<mosaic_0001>
module attributes {stable_mosaic.version = 11 : i64} {
  func.func @_hbm_copy_kernel(%arg0: memref<2x1024xf32, #tpu.memory_space<any>>, %arg1: memref<2x1024xf32, #tpu.memory_space<any>>, %arg2: memref<!tpu.dma_semaphore, #tpu.memory_space<semaphore_mem>>) attributes {dimension_semantics = [], scalar_prefetch = 0 : i64, scratch_operands = 1 : i64, tpu.core_type = #tpu.core_type<tc>} {
    tpu.enqueue_dma source(%arg0 : memref<2x1024xf32, #tpu.memory_space<any>>) target(%arg1 : memref<2x1024xf32, #tpu.memory_space<any>>) target_semaphore(%arg2 : memref<!tpu.dma_semaphore, #tpu.memory_space<semaphore_mem>>)
    tpu.wait_dma2 semaphore(%arg2 : memref<!tpu.dma_semaphore, #tpu.memory_space<semaphore_mem>>) src(%arg0 : memref<2x1024xf32, #tpu.memory_space<any>>) dst(%arg1 : memref<2x1024xf32, #tpu.memory_space<any>>)
    return
  }
}

</mosaic_0001>

<llo_original>
// kernel: tpu_custom_call.1
$region0: #{tpu_custom_call.1}
  #allocation0 [shape = 'u32[]', space=smem, size = 0x4, offset = 0x4, fixed_abs, tag = 'smem constant byte address 0x4 - core index']
  #allocation1 [shape = 'u32[144,128]{1,0:T(1,128)}', space=vmem, size = 0x12000, scoped, tag = 'internal scratch']
  #allocation2 [shape = 's32[1]{0}', space=sflag, size = 0x4, scoped, tag = 'scratch operand']
  #allocation3 [shape = 's32[]', space=sflag, size = 0x4, offset = 0, fixed_abs, tag = 'sflag constant byte address 0x0 - dummy sync flag']
  #allocation4 [shape = 'u32[0]{0}', space=smem, size = 0, offset = 0, fixed_abs, tag = 'smem constant byte address 0x0 - null']
  %s0 = inlined_call_operand.hbm [shape: f32[2,1024], index: 0, kind: input, shape index: {}]
  %s1 = inlined_call_operand.hbm [shape: f32[2,1024], index: 1, kind: output, shape index: {}]
  %s2 = sld [smem:[#allocation0]]
  $region2: #{tpu_custom_call.1} parent=0
    _
  %s4 = ssub.s32 1, %s2
  %s5 = scalar_select 0, %s4, %s2
  %s7 = sshll.u32 1, 14
  %s8 = sxor.u32 4294967295, %s7
  %s11 = sshll.u32 3, 24
  %s12 = sxor.u32 4294967295, %s11
  %s13 = sand.u32 0, %s12
  %s15 = sor.u32 %s13, 0
  %18 = dma.general %s0, 256, %s1, [#allocation2], [#allocation3], [#allocation4], %s15, 0
  %s19 = smul.u32 2, 1
  %s20 = smul.u32 %s19, 8
  %s21 = sshll.u32 %s20, 4
  %22 = dma.done [#allocation2], %s21
  %23 = vsyncmov [#allocation2]
  %s24 = vpop.sfrf %23
  %p25 = scmp.eq.s32.totalorder %s24, 0
  %p26 = pneg %p25
  %28 = shalt.err (%p26)

</llo_original>
